<compile_context>
chip_gen: v7x
topology: tpu7x:2x2x1
jax: 0.10.0
libtpu: 0.0.40
codegen_flags: <defaults>
</compile_context>

<pallas_src>
import functools

import jax
import jax.numpy as jnp
from jax.experimental import pallas as pl
from jax.experimental.pallas import tpu as pltpu


def _pick_tile(total: int, target: int = 1024) -> int:
    """Largest multiple of 128 <= target that evenly divides `total`
    (falls back to the full axis)."""
    if total <= target:
        return total
    t = (min(target, total) // 128) * 128
    while t >= 128:
        if total % t == 0:
            return t
        t -= 128
    return total


def _fused_mlp_kernel(x_ref, w1_ref, b1_ref, w2_ref, b2_ref, out_ref,
                      acc1_ref, a1_ref, *, nk1, nk2, th):
    """Phased grid: steps [0, nk1) -> layer 1 (relu(x@W1+b1) into a1 VMEM),
    steps [nk1, nk1+nk2) -> layer 2 (a1@W2+b2 into the resident output)."""
    s = pl.program_id(0)

    # ------------------------- layer 1 phase -------------------------------
    @pl.when(s < nk1)
    def _layer1():
        @pl.when(s == 0)
        def _init1():
            # Fold the bias into the accumulator init -> added exactly once.
            acc1_ref[...] = jnp.broadcast_to(
                b1_ref[...].astype(jnp.float32), acc1_ref.shape)

        # x is resident; pick the K-chunk matching this W1 row-tile by a
        # dynamic index on the leading axis (well-supported, no lane slicing).
        acc1_ref[...] += jnp.dot(x_ref[s], w1_ref[...],
                                 preferred_element_type=jnp.float32)

        @pl.when(s == nk1 - 1)
        def _finish1():
            a1f = jnp.maximum(acc1_ref[...], 0.0)
            # Static split of the (B, H) activation into layer-2 H-tiles.
            for j in range(nk2):
                a1_ref[j] = a1f[:, j * th:(j + 1) * th].astype(a1_ref.dtype)

    # ------------------------- layer 2 phase -------------------------------
    @pl.when(s >= nk1)
    def _layer2():
        j = s - nk1

        @pl.when(j == 0)
        def _init2():
            out_ref[...] = jnp.broadcast_to(
                b2_ref[...].astype(jnp.float32), out_ref.shape)

        # Contiguous (th, D) row-tile of W2 against the matching a1 chunk,
        # accumulated directly into the resident f32 output block.
        out_ref[...] += jnp.dot(a1_ref[j], w2_ref[...],
                                preferred_element_type=jnp.float32)


def create_soft_prompt(h_g, h_t, w1, b1, w2, b2, *, tk=None, th=None):
    """h_g: [B, D], h_t: [Nt, D] or None, w1: [2D, H] (bf16 recommended),
    b1: [H], w2: [H, D] (bf16 recommended), b2: [D].  Returns f32 [B, D].

    tk: layer-1 K-reduction tile (rows of W1).  th: layer-2 H-reduction
    tile (rows of W2).  Defaults target 1024; pass 2048 on v7x."""
    B, D = h_g.shape
    K, H = w1.shape                       # K == 2 * D
    assert K == 2 * D and w2.shape == (H, D)
    assert b1.shape == (H,) and b2.shape == (D,)

    # Tiny [B, 2D] activation built outside the weight-streaming hot path.
    if h_t is None:
        h_t_mean = jnp.zeros((1, D), h_g.dtype)
    else:
        h_t_mean = jnp.mean(h_t, axis=0, keepdims=True)
    x = jnp.concatenate(
        [h_g, jnp.broadcast_to(h_t_mean, (B, D))], axis=-1).astype(w1.dtype)

    tk = _pick_tile(K) if tk is None else tk
    th = _pick_tile(H) if th is None else th
    assert K % tk == 0, f"tk={tk} must evenly divide K={K}"
    assert H % th == 0, f"th={th} must evenly divide H={H}"
    nk1 = K // tk
    nk2 = H // th

    # Resident x, pre-chunked along K on the leading axis: x3[i] = x[:, i*tk:(i+1)*tk]
    x3 = x.reshape(B, nk1, tk).transpose(1, 0, 2)

    b1_2d = b1.reshape(1, H).astype(jnp.float32)
    b2_2d = b2.reshape(1, D).astype(jnp.float32)

    wbytes = w1.dtype.itemsize

    # Scoped-VMEM budget: double-buffered weight tiles dominate; pad the
    # small-row operands to full sublane tiles and add headroom.  Setting it
    # explicitly keeps 1024-wide tiles working on v5e's 16 MiB default.
    vmem_need = (2 * tk * H * wbytes            # W1 tiles, double-buffered
                 + 2 * th * D * wbytes          # W2 tiles, double-buffered
                 + 2 * nk1 * 16 * tk * wbytes   # resident x3 (sublane-padded)
                 + nk2 * 16 * th * wbytes       # a1 scratch (sublane-padded)
                 + 16 * H * 4                   # acc1 scratch (padded)
                 + 2 * 16 * D * 4               # output block (padded)
                 + 4 * (H + D) * 4)             # biases
    vmem_limit = int(min(max(vmem_need + (4 << 20), 32 << 20), 60 << 20))

    kernel = functools.partial(_fused_mlp_kernel, nk1=nk1, nk2=nk2, th=th)

    out = pl.pallas_call(
        kernel,
        out_shape=jax.ShapeDtypeStruct((B, D), jnp.float32),
        grid=(nk1 + nk2,),
        in_specs=[
            # x: fully resident (one small DMA, constant block index).
            pl.BlockSpec((nk1, B, tk), lambda s: (0, 0, 0)),
            # W1 row-tiles, clamped so phase 2 never re-fetches.
            pl.BlockSpec((tk, H), lambda s: (jnp.minimum(s, nk1 - 1), 0)),
            pl.BlockSpec((1, H), lambda s: (0, 0)),
            # W2 row-tiles (contiguous), block 0 prefetched during phase 1.
            pl.BlockSpec((th, D), lambda s: (jnp.maximum(s - nk1, 0), 0)),
            pl.BlockSpec((1, D), lambda s: (0, 0)),
        ],
        out_specs=pl.BlockSpec((B, D), lambda s: (0, 0)),
        scratch_shapes=[
            pltpu.VMEM((B, H), jnp.float32),       # layer-1 f32 accumulator
            pltpu.VMEM((nk2, B, th), w2.dtype),    # relu'd a1, chunked by H-tile
        ],
        compiler_params=pltpu.CompilerParams(
            dimension_semantics=("arbitrary",),
            vmem_limit_bytes=vmem_limit),
        cost_estimate=pl.CostEstimate(
            flops=2 * B * K * H + 2 * B * H * D,
            transcendentals=0,
            bytes_accessed=(K * H + H * D) * wbytes + B * K * wbytes
                           + 4 * (H + D) + B * D * 4),
    )(x3, w1, b1_2d, w2, b2_2d)
    return out


def create_soft_prompt_ref(h_g, h_t, w1, b1, w2, b2):
    """Pure-JAX reference mirroring PyTorch create_soft_prompt() with the
    same bf16 weight/activation storage as the kernel."""
    B, D = h_g.shape
    if h_t is None:
        h_t_mean = jnp.zeros((1, D), h_g.dtype)
    else:
        h_t_mean = jnp.mean(h_t, axis=0, keepdims=True)
    x = jnp.concatenate(
        [h_g, jnp.broadcast_to(h_t_mean, (B, D))], axis=-1).astype(w1.dtype)
    z1 = jnp.dot(x, w1, preferred_element_type=jnp.float32) \
        + b1.astype(jnp.float32)
    a1 = jnp.maximum(z1, 0.0).astype(w2.dtype)
    return jnp.dot(a1, w2, preferred_element_type=jnp.float32) \
        + b2.astype(jnp.float32)


if __name__ == "__main__":
    # Small shapes consistent with the module's structure
    # (real model uses D_LLM=4096, D_HID=2048).
    B = 4        # batch of questions
    NT = 8       # number of text-node embeddings h_t
    D_LLM = 256  # LLM hidden size (stand-in for 4096)
    D_HID = 256  # projector hidden size (stand-in for 2048)

    key = jax.random.PRNGKey(0)
    k_hg, k_ht, k_w1, k_b1, k_w2, k_b2 = jax.random.split(key, 6)

    h_g = jax.random.normal(k_hg, (B, D_LLM), dtype=jnp.float32)
    h_t = jax.random.normal(k_ht, (NT, D_LLM), dtype=jnp.float32)

    # PyTorch-Linear-like uniform init; weights stored in bf16 (streamed
    # half-precision), biases in f32.
    lim1 = 1.0 / jnp.sqrt(2.0 * D_LLM)
    lim2 = 1.0 / jnp.sqrt(1.0 * D_HID)
    w1 = jax.random.uniform(k_w1, (2 * D_LLM, D_HID), jnp.float32,
                            -lim1, lim1).astype(jnp.bfloat16)
    b1 = jax.random.uniform(k_b1, (D_HID,), jnp.float32, -lim1, lim1)
    w2 = jax.random.uniform(k_w2, (D_HID, D_LLM), jnp.float32,
                            -lim2, lim2).astype(jnp.bfloat16)
    b2 = jax.random.uniform(k_b2, (D_LLM,), jnp.float32, -lim2, lim2)

    # TODO(synk): the frozen LLaMA forward (causal-LM loss), tokenizer, LoRA,
    # and the external Explore graph encoder are pretrained/external
    # components with no in-script Pallas equivalent; only the soft-prompt
    # projection is kernelized.

    ref = create_soft_prompt_ref(h_g, h_t, w1, b1, w2, b2)

    # (1) Small tiles so the test exercises the multi-step K phase and the
    #     multi-step W2 row-streaming phase of the fused kernel.
    out_small = create_soft_prompt(h_g, h_t, w1, b1, w2, b2, tk=128, th=128)
    out_small = jax.block_until_ready(out_small)
    assert out_small.shape == (B, D_LLM)
    assert out_small.dtype == jnp.float32
    assert jnp.allclose(out_small, ref, atol=1e-2, rtol=1e-2)

    # (2) Default tile selection (single-step phases at these small shapes,
    #     ~1024-wide tiles at real shapes).
    out_default = create_soft_prompt(h_g, h_t, w1, b1, w2, b2)
    out_default = jax.block_until_ready(out_default)
    assert jnp.allclose(out_default, ref, atol=1e-2, rtol=1e-2)

    print("KERNEL_OK")
</pallas_src>

<mosaic_0001>
module attributes {stable_mosaic.version = 11 : i64} {
  func.func @_fused_mlp_kernel(%arg0: i32, %arg1: memref<4x4x128xbf16, #tpu.memory_space<vmem>>, %arg2: memref<128x256xbf16, #tpu.memory_space<vmem>>, %arg3: memref<1x256xf32, #tpu.memory_space<vmem>>, %arg4: memref<128x256xbf16, #tpu.memory_space<vmem>>, %arg5: memref<1x256xf32, #tpu.memory_space<vmem>>, %arg6: memref<4x256xf32, #tpu.memory_space<vmem>>, %arg7: memref<4x256xf32, #tpu.memory_space<vmem>>, %arg8: memref<2x4x128xbf16, #tpu.memory_space<vmem>>) attributes {dimension_semantics = [#tpu.dimension_semantics<arbitrary>], iteration_bounds = array<i64: 6>, scalar_prefetch = 0 : i64, scratch_operands = 2 : i64, tpu.core_type = #tpu.core_type<tc>, window_params = [{pipeline_mode = #tpu.pipeline_mode<synchronous>, transform_indices = @transform_0, window_bounds = array<i64: 4, 4, 128>}, {transform_indices = @transform_1, window_bounds = array<i64: 128, 256>}, {pipeline_mode = #tpu.pipeline_mode<synchronous>, transform_indices = @transform_2, window_bounds = array<i64: 1, 256>}, {transform_indices = @transform_3, window_bounds = array<i64: 128, 256>}, {pipeline_mode = #tpu.pipeline_mode<synchronous>, transform_indices = @transform_4, window_bounds = array<i64: 1, 256>}, {pipeline_mode = #tpu.pipeline_mode<synchronous>, transform_indices = @transform_5, window_bounds = array<i64: 4, 256>}]} {
    %c4_i32 = arith.constant 4 : i32
    %0 = arith.cmpi slt, %arg0, %c4_i32 : i32
    %1 = arith.extui %0 : i1 to i32
    %c0_i32 = arith.constant 0 : i32
    %2 = arith.cmpi ne, %1, %c0_i32 : i32
    scf.if %2 {
      %c0_i32_2 = arith.constant 0 : i32
      %6 = arith.cmpi eq, %arg0, %c0_i32_2 : i32
      %7 = arith.extui %6 : i1 to i32
      %c0_i32_3 = arith.constant 0 : i32
      %8 = arith.cmpi ne, %7, %c0_i32_3 : i32
      scf.if %8 {
        %c0_12 = arith.constant 0 : index
        %c0_13 = arith.constant 0 : index
        %20 = vector.load %arg3[%c0_12, %c0_13] : memref<1x256xf32, #tpu.memory_space<vmem>>, vector<1x256xf32>
        %21 = vector.shape_cast %20 : vector<1x256xf32> to vector<1x256xf32>
        %22 = vector.broadcast %21 : vector<1x256xf32> to vector<4x256xf32>
        %c0_14 = arith.constant 0 : index
        %c0_15 = arith.constant 0 : index
        %23 = vector.load %arg7[%c0_14, %c0_15] : memref<4x256xf32, #tpu.memory_space<vmem>>, vector<4x256xf32>
        tpu.vector_store %arg7[%c0_14, %c0_15], %22 {strides = array<i32>} : memref<4x256xf32, #tpu.memory_space<vmem>>, vector<4x256xf32>,
      } else {
      }
      %c0 = arith.constant 0 : index
      %c0_4 = arith.constant 0 : index
      %9 = vector.load %arg7[%c0, %c0_4] : memref<4x256xf32, #tpu.memory_space<vmem>>, vector<4x256xf32>
      %10 = arith.index_cast %arg0 : i32 to index
      %c0_5 = arith.constant 0 : index
      %c0_6 = arith.constant 0 : index
      %11 = vector.load %arg1[%10, %c0_5, %c0_6] : memref<4x4x128xbf16, #tpu.memory_space<vmem>>, vector<1x4x128xbf16>
      %12 = vector.shape_cast %11 : vector<1x4x128xbf16> to vector<4x128xbf16>
      %c0_7 = arith.constant 0 : index
      %c0_8 = arith.constant 0 : index
      %13 = vector.load %arg2[%c0_7, %c0_8] : memref<128x256xbf16, #tpu.memory_space<vmem>>, vector<128x256xbf16>
      %cst = arith.constant dense<0.000000e+00> : vector<4x256xf32>
      %14 = tpu.matmul %12, %13, %cst {dimension_numbers = #tpu.dot_dimension_numbers<[1], [0], [0], [1], [0, 0, 1, 1], [], []>} : vector<4x128xbf16>, vector<128x256xbf16>, vector<4x256xf32> -> vector<4x256xf32>
      %15 = arith.addf %9, %14 : vector<4x256xf32>
      %c0_9 = arith.constant 0 : index
      %c0_10 = arith.constant 0 : index
      %16 = vector.load %arg7[%c0_9, %c0_10] : memref<4x256xf32, #tpu.memory_space<vmem>>, vector<4x256xf32>
      tpu.vector_store %arg7[%c0_9, %c0_10], %15 {strides = array<i32>} : memref<4x256xf32, #tpu.memory_space<vmem>>, vector<4x256xf32>,
      %c3_i32 = arith.constant 3 : i32
      %17 = arith.cmpi eq, %arg0, %c3_i32 : i32
      %18 = arith.extui %17 : i1 to i32
      %c0_i32_11 = arith.constant 0 : i32
      %19 = arith.cmpi ne, %18, %c0_i32_11 : i32
      scf.if %19 {
        %c0_12 = arith.constant 0 : index
        %c0_13 = arith.constant 0 : index
        %20 = vector.load %arg7[%c0_12, %c0_13] : memref<4x256xf32, #tpu.memory_space<vmem>>, vector<4x256xf32>
        %cst_14 = arith.constant 0.000000e+00 : f32
        %21 = vector.broadcast %cst_14 : f32 to vector<4x256xf32>
        %22 = arith.maximumf %20, %21 : vector<4x256xf32>
        %23 = vector.extract_strided_slice %22 {offsets = [0, 0], sizes = [4, 128], strides = [1, 1]} : vector<4x256xf32> to vector<4x128xf32>
        %24 = arith.truncf %23 : vector<4x128xf32> to vector<4x128xbf16>
        %c0_15 = arith.constant 0 : index
        %c0_16 = arith.constant 0 : index
        %c0_17 = arith.constant 0 : index
        %25 = vector.load %arg8[%c0_15, %c0_16, %c0_17] : memref<2x4x128xbf16, #tpu.memory_space<vmem>>, vector<1x4x128xbf16>
        %26 = vector.shape_cast %25 : vector<1x4x128xbf16> to vector<4x128xbf16>
        %27 = vector.shape_cast %24 : vector<4x128xbf16> to vector<1x4x128xbf16>
        tpu.vector_store %arg8[%c0_15, %c0_16, %c0_17], %27 {strides = array<i32>} : memref<2x4x128xbf16, #tpu.memory_space<vmem>>, vector<1x4x128xbf16>,
        %28 = vector.extract_strided_slice %22 {offsets = [0, 128], sizes = [4, 128], strides = [1, 1]} : vector<4x256xf32> to vector<4x128xf32>
        %29 = arith.truncf %28 : vector<4x128xf32> to vector<4x128xbf16>
        %c1 = arith.constant 1 : index
        %c0_18 = arith.constant 0 : index
        %c0_19 = arith.constant 0 : index
        %30 = vector.load %arg8[%c1, %c0_18, %c0_19] : memref<2x4x128xbf16, #tpu.memory_space<vmem>>, vector<1x4x128xbf16>
        %31 = vector.shape_cast %30 : vector<1x4x128xbf16> to vector<4x128xbf16>
        %32 = vector.shape_cast %29 : vector<4x128xbf16> to vector<1x4x128xbf16>
        tpu.vector_store %arg8[%c1, %c0_18, %c0_19], %32 {strides = array<i32>} : memref<2x4x128xbf16, #tpu.memory_space<vmem>>, vector<1x4x128xbf16>,
      } else {
      }
    } else {
    }
    %c4_i32_0 = arith.constant 4 : i32
    %3 = arith.cmpi sge, %arg0, %c4_i32_0 : i32
    %4 = arith.extui %3 : i1 to i32
    %c0_i32_1 = arith.constant 0 : i32
    %5 = arith.cmpi ne, %4, %c0_i32_1 : i32
    scf.if %5 {
      %c4_i32_2 = arith.constant 4 : i32
      %6 = arith.subi %arg0, %c4_i32_2 : i32
      %c0_i32_3 = arith.constant 0 : i32
      %7 = arith.cmpi eq, %6, %c0_i32_3 : i32
      %8 = arith.extui %7 : i1 to i32
      %c0_i32_4 = arith.constant 0 : i32
      %9 = arith.cmpi ne, %8, %c0_i32_4 : i32
      scf.if %9 {
        %c0_12 = arith.constant 0 : index
        %c0_13 = arith.constant 0 : index
        %18 = vector.load %arg5[%c0_12, %c0_13] : memref<1x256xf32, #tpu.memory_space<vmem>>, vector<1x256xf32>
        %19 = vector.shape_cast %18 : vector<1x256xf32> to vector<1x256xf32>
        %20 = vector.broadcast %19 : vector<1x256xf32> to vector<4x256xf32>
        %c0_14 = arith.constant 0 : index
        %c0_15 = arith.constant 0 : index
        %21 = vector.load %arg6[%c0_14, %c0_15] : memref<4x256xf32, #tpu.memory_space<vmem>>, vector<4x256xf32>
        tpu.vector_store %arg6[%c0_14, %c0_15], %20 {strides = array<i32>} : memref<4x256xf32, #tpu.memory_space<vmem>>, vector<4x256xf32>,
      } else {
      }
      %c0 = arith.constant 0 : index
      %c0_5 = arith.constant 0 : index
      %10 = vector.load %arg6[%c0, %c0_5] : memref<4x256xf32, #tpu.memory_space<vmem>>, vector<4x256xf32>
      %11 = arith.index_cast %6 : i32 to index
      %c0_6 = arith.constant 0 : index
      %c0_7 = arith.constant 0 : index
      %12 = vector.load %arg8[%11, %c0_6, %c0_7] : memref<2x4x128xbf16, #tpu.memory_space<vmem>>, vector<1x4x128xbf16>
      %13 = vector.shape_cast %12 : vector<1x4x128xbf16> to vector<4x128xbf16>
      %c0_8 = arith.constant 0 : index
      %c0_9 = arith.constant 0 : index
      %14 = vector.load %arg4[%c0_8, %c0_9] : memref<128x256xbf16, #tpu.memory_space<vmem>>, vector<128x256xbf16>
      %cst = arith.constant dense<0.000000e+00> : vector<4x256xf32>
      %15 = tpu.matmul %13, %14, %cst {dimension_numbers = #tpu.dot_dimension_numbers<[1], [0], [0], [1], [0, 0, 1, 1], [], []>} : vector<4x128xbf16>, vector<128x256xbf16>, vector<4x256xf32> -> vector<4x256xf32>
      %16 = arith.addf %10, %15 : vector<4x256xf32>
      %c0_10 = arith.constant 0 : index
      %c0_11 = arith.constant 0 : index
      %17 = vector.load %arg6[%c0_10, %c0_11] : memref<4x256xf32, #tpu.memory_space<vmem>>, vector<4x256xf32>
      tpu.vector_store %arg6[%c0_10, %c0_11], %16 {strides = array<i32>} : memref<4x256xf32, #tpu.memory_space<vmem>>, vector<4x256xf32>,
    } else {
    }
    return
  }
  func.func @transform_0(%arg0: i32) -> (i32, i32, i32) {
    %c0_i32 = arith.constant 0 : i32
    %c0_i32_0 = arith.constant 0 : i32
    %c0_i32_1 = arith.constant 0 : i32
    %c0_i32_2 = arith.constant 0 : i32
    return %c0_i32, %c0_i32_0, %c0_i32_1 : i32, i32, i32
  }
  func.func @transform_1(%arg0: i32) -> (i32, i32) {
    %c3_i32 = arith.constant 3 : i32
    %0 = arith.minsi %arg0, %c3_i32 : i32
    %c0_i32 = arith.constant 0 : i32
    %c0_i32_0 = arith.constant 0 : i32
    return %0, %c0_i32 : i32, i32
  }
  func.func @transform_2(%arg0: i32) -> (i32, i32) {
    %c0_i32 = arith.constant 0 : i32
    %c0_i32_0 = arith.constant 0 : i32
    %c0_i32_1 = arith.constant 0 : i32
    return %c0_i32, %c0_i32_0 : i32, i32
  }
  func.func @transform_3(%arg0: i32) -> (i32, i32) {
    %c4_i32 = arith.constant 4 : i32
    %0 = arith.subi %arg0, %c4_i32 : i32
    %c0_i32 = arith.constant 0 : i32
    %1 = arith.maxsi %0, %c0_i32 : i32
    %c0_i32_0 = arith.constant 0 : i32
    %c0_i32_1 = arith.constant 0 : i32
    return %1, %c0_i32_0 : i32, i32
  }
  func.func @transform_4(%arg0: i32) -> (i32, i32) {
    %c0_i32 = arith.constant 0 : i32
    %c0_i32_0 = arith.constant 0 : i32
    %c0_i32_1 = arith.constant 0 : i32
    return %c0_i32, %c0_i32_0 : i32, i32
  }
  func.func @transform_5(%arg0: i32) -> (i32, i32) {
    %c0_i32 = arith.constant 0 : i32
    %c0_i32_0 = arith.constant 0 : i32
    %c0_i32_1 = arith.constant 0 : i32
    return %c0_i32, %c0_i32_0 : i32, i32
  }
}

</mosaic_0001>

<llo_original>
// kernel: tpu_custom_call.1
$region0: #{tpu_custom_call.1}
  #allocation0 [shape = 'u32[]', space=smem, size = 0x4, offset = 0x4, fixed_abs, tag = 'smem constant byte address 0x4 - core index']
  #allocation1 [shape = 'u32[144,128]{1,0:T(1,128)}', space=vmem, size = 0x12000, scoped, tag = 'internal scratch']
  #allocation2 [shape = 'f32[4,256]{1,0:T(4,128)}', space=vmem, size = 0x1000, scoped, tag = 'scratch operand']
  #allocation3 [shape = 'bf16[2,4,128]{2,1,0:T(4,128)(2,1)}', space=vmem, size = 0x800, scoped, tag = 'scratch operand']
  %s0 = inlined_call_operand.hbm [shape: bf16[4,4,128], index: 0, kind: input, shape index: {}]
  %s1 = inlined_call_operand.hbm [shape: bf16[512,256], index: 1, kind: input, shape index: {}]
  %s2 = inlined_call_operand.vmem [shape: f32[1,256], index: 2, kind: input, shape index: {}]
  %s3 = inlined_call_operand.hbm [shape: bf16[256,256], index: 3, kind: input, shape index: {}]
  %s4 = inlined_call_operand.vmem [shape: f32[1,256], index: 4, kind: input, shape index: {}]
  %s5 = inlined_call_operand.hbm [shape: f32[4,256], index: 5, kind: output, shape index: {}]
  %s6 = sld [smem:[#allocation0]]
  $region85: #{tpu_custom_call.1} parent=0
    _
  %s8 = ssub.s32 1, %s6
  %s9 = scalar_select 0, %s8, %s6
  $region1: #{tpu_custom_call.1} parent=0
    #allocation4 [shape = 'u8[4096]{0}', space=vmem, size = 0x1000, scoped, tag = 'input window, operand 0, single buffered']
    #allocation5 [shape = 's32[2]{0}', space=sflag, size = 0x8, scoped, tag = 'scoped memory for tpu_custom_call.1']
    #allocation6 [shape = 's32[2]{0}', space=sflag, size = 0x8, scoped, tag = 'scoped memory for tpu_custom_call.1']
    #allocation7 [shape = 'u8[131072]{0}', space=vmem, size = 0x20000, scoped, tag = 'input window, operand 1']
    #allocation8 [shape = 's32[2]{0}', space=sflag, size = 0x8, scoped, tag = 'scoped memory for tpu_custom_call.1']
    #allocation9 [shape = 'u8[131072]{0}', space=vmem, size = 0x20000, scoped, tag = 'input window, operand 3']
    #allocation10 [shape = 'u8[4096]{0}', space=vmem, size = 0x1000, scoped, tag = 'output window, operand 0, single buffered']
    %10 = vsyncpa [#allocation5], 0
    %11 = vsyncpa [#allocation8], 0
    %s12 = scalar_lea.sflag [#allocation8], 1
    %13 = vsyncpa %s12, 0
    %14 = vsyncpa [#allocation6], 0
    loop: start=0, step=1, limit=8
    $region2: #{tpu_custom_call.1} parent=1 // loop_pre_header
      _
    $region3: #{tpu_custom_call.1} parent=1 // loop_header
      %s16 = sphi 0, %s20
      %p17 = scmp.ge.s32.totalorder %s16, 8
      %s24 = sphi 0, %s24
      %s26 = sphi 0, %s24
      %s27 = sphi 0, %s26
      %s41 = sphi 0, %s27
      %s51 = sphi 0, %s53
      %s54 = sphi 0, %s51
      %s55 = sphi 0, %s54
      %s71 = sphi 0, %s55
      %s75 = sphi 0, %s75
      %s77 = sphi 0, %s75
      %s78 = sphi 0, %s77
      %s92 = sphi 0, %s78
      %s104 = sphi 0, %s106
      %s107 = sphi 0, %s104
      %s108 = sphi 0, %s107
      %s124 = sphi 0, %s108
      %s128 = sphi 0, %s128
      %s130 = sphi 0, %s128
      %s131 = sphi 0, %s130
      %s145 = sphi 0, %s131
      %s149 = sphi 0, %s149
      %s151 = sphi 0, %s149
      %s152 = sphi 0, %s151
      %s166 = sphi 0, %s152
    $region4: #{tpu_custom_call.1} parent=1 // loop_header_branch
      %19 = sbr.rel (%p17) target = $region8
    $region5: #{tpu_custom_call.1} parent=1 // loop_body
      %s21 = ssub.s32 %s16, 1
      %s22 = ssub.s32 %s16, 2
      %s23 = sadd.s32 %s16, 1
      %s25 = sadd.s32 %s24, 1
      %p28 = scmp.eq.s32.totalorder %s16, 5
      %p29 = scmp.ne.s32.totalorder %s24, %s26
      %p30 = scmp.eq.s32.totalorder %s16, 0
      %p31 = por %p29, %p30
      %p32 = scmp.ne.s32.totalorder %s24, %s26
      %p33 = scmp.eq.s32.totalorder %s21, 5
      %p34 = por %p32, %p33
      %p35 = scmp.ne.s32.totalorder %s26, %s27
      %p36 = scmp.eq.s32.totalorder %s21, 0
      %p37 = por %p35, %p36
      %p38 = scmp.ne.s32.totalorder %s26, %s27
      %p39 = scmp.eq.s32.totalorder %s22, 5
      %p40 = por %p38, %p39
      %p42 = scmp.ne.s32.totalorder %s27, %s41
      %p43 = scmp.eq.s32.totalorder %s22, 0
      %p44 = por %p42, %p43
      %p45 = scmp.lt.s32.totalorder %s16, 3
      %s46 = scalar_select %p45, %s16, 3
      %p47 = scmp.lt.s32.totalorder %s23, 3
      %s48 = scalar_select %p47, %s23, 3
      %s49 = ssub.s32 %s46, %s48
      %p50 = scmp.eq.s32.totalorder %s49, 0
      %s52 = sadd.s32 %s51, 1
      %s53 = scalar_select %p50, %s51, %s52
      %p56 = pneg %p50
      %p57 = scmp.eq.s32.totalorder %s16, 5
      %p58 = por %p56, %p57
      %p59 = scmp.ne.s32.totalorder %s51, %s54
      %p60 = scmp.eq.s32.totalorder %s16, 0
      %p61 = por %p59, %p60
      %p62 = scmp.ne.s32.totalorder %s51, %s54
      %p63 = scmp.eq.s32.totalorder %s21, 5
      %p64 = por %p62, %p63
      %p65 = scmp.ne.s32.totalorder %s54, %s55
      %p66 = scmp.eq.s32.totalorder %s21, 0
      %p67 = por %p65, %p66
      %p68 = scmp.ne.s32.totalorder %s54, %s55
      %p69 = scmp.eq.s32.totalorder %s22, 5
      %p70 = por %p68, %p69
      %p72 = scmp.ne.s32.totalorder %s55, %s71
      %p73 = scmp.eq.s32.totalorder %s22, 0
      %p74 = por %p72, %p73
      %s76 = sadd.s32 %s75, 1
      %p79 = scmp.eq.s32.totalorder %s16, 5
      %p80 = scmp.ne.s32.totalorder %s75, %s77
      %p81 = scmp.eq.s32.totalorder %s16, 0
      %p82 = por %p80, %p81
      %p83 = scmp.ne.s32.totalorder %s75, %s77
      %p84 = scmp.eq.s32.totalorder %s21, 5
      %p85 = por %p83, %p84
      %p86 = scmp.ne.s32.totalorder %s77, %s78
      %p87 = scmp.eq.s32.totalorder %s21, 0
      %p88 = por %p86, %p87
      %p89 = scmp.ne.s32.totalorder %s77, %s78
      %p90 = scmp.eq.s32.totalorder %s22, 5
      %p91 = por %p89, %p90
      %p93 = scmp.ne.s32.totalorder %s78, %s92
      %p94 = scmp.eq.s32.totalorder %s22, 0
      %p95 = por %p93, %p94
      %s96 = ssub.s32 %s16, 4
      %p97 = scmp.gt.s32.totalorder %s96, 0
      %s98 = scalar_select %p97, %s96, 0
      %s99 = ssub.s32 %s23, 4
      %p100 = scmp.gt.s32.totalorder %s99, 0
      %s101 = scalar_select %p100, %s99, 0
      %s102 = ssub.s32 %s98, %s101
      %p103 = scmp.eq.s32.totalorder %s102, 0
      %s105 = sadd.s32 %s104, 1
      %s106 = scalar_select %p103, %s104, %s105
      %p109 = pneg %p103
      %p110 = scmp.eq.s32.totalorder %s16, 5
      %p111 = por %p109, %p110
      %p112 = scmp.ne.s32.totalorder %s104, %s107
      %p113 = scmp.eq.s32.totalorder %s16, 0
      %p114 = por %p112, %p113
      %p115 = scmp.ne.s32.totalorder %s104, %s107
      %p116 = scmp.eq.s32.totalorder %s21, 5
      %p117 = por %p115, %p116
      %p118 = scmp.ne.s32.totalorder %s107, %s108
      %p119 = scmp.eq.s32.totalorder %s21, 0
      %p120 = por %p118, %p119
      %p121 = scmp.ne.s32.totalorder %s107, %s108
      %p122 = scmp.eq.s32.totalorder %s22, 5
      %p123 = por %p121, %p122
      %p125 = scmp.ne.s32.totalorder %s108, %s124
      %p126 = scmp.eq.s32.totalorder %s22, 0
      %p127 = por %p125, %p126
      %s129 = sadd.s32 %s128, 1
      %p132 = scmp.eq.s32.totalorder %s16, 5
      %p133 = scmp.ne.s32.totalorder %s128, %s130
      %p134 = scmp.eq.s32.totalorder %s16, 0
      %p135 = por %p133, %p134
      %p136 = scmp.ne.s32.totalorder %s128, %s130
      %p137 = scmp.eq.s32.totalorder %s21, 5
      %p138 = por %p136, %p137
      %p139 = scmp.ne.s32.totalorder %s130, %s131
      %p140 = scmp.eq.s32.totalorder %s21, 0
      %p141 = por %p139, %p140
      %p142 = scmp.ne.s32.totalorder %s130, %s131
      %p143 = scmp.eq.s32.totalorder %s22, 5
      %p144 = por %p142, %p143
      %p146 = scmp.ne.s32.totalorder %s131, %s145
      %p147 = scmp.eq.s32.totalorder %s22, 0
      %p148 = por %p146, %p147
      %s150 = sadd.s32 %s149, 1
      %p153 = scmp.eq.s32.totalorder %s16, 5
      %p154 = scmp.ne.s32.totalorder %s149, %s151
      %p155 = scmp.eq.s32.totalorder %s16, 0
      %p156 = por %p154, %p155
      %p157 = scmp.ne.s32.totalorder %s149, %s151
      %p158 = scmp.eq.s32.totalorder %s21, 5
      %p159 = por %p157, %p158
      %p160 = scmp.ne.s32.totalorder %s151, %s152
      %p161 = scmp.eq.s32.totalorder %s21, 0
      %p162 = por %p160, %p161
      %p163 = scmp.ne.s32.totalorder %s151, %s152
      %p164 = scmp.eq.s32.totalorder %s22, 5
      %p165 = por %p163, %p164
      %p167 = scmp.ne.s32.totalorder %s152, %s166
      %p168 = scmp.eq.s32.totalorder %s22, 0
      %p169 = por %p167, %p168
      %p170 = scmp.le.s32.totalorder 1, %s16
      %p171 = scmp.lt.s32.totalorder %s16, 7
      %p172 = pnand %p170, %p171
      %p173 = pneg %p172
      // Predicated region
      $region9: #{tpu_custom_call.1} parent=5 // pred_check
        _
      $region10: #{tpu_custom_call.1} parent=5 // pred_check_branch
        %175 = sbr.rel (%p172) target = $region12
      $region11: #{tpu_custom_call.1} parent=5 // pred_region
        %s176 = ssub.s32 %s16, 1
        // Predicated region
        $region13: #{tpu_custom_call.1} parent=11 // pred_check
          %p177 = pneg %p37
        $region14: #{tpu_custom_call.1} parent=11 // pred_check_branch
          %179 = sbr.rel (%p177) target = $region16
        $region15: #{tpu_custom_call.1} parent=11 // pred_region
          %s181 = ssub.s32 128, 128
          %182 = vsyncadd [#allocation5], %s181
          %s183 = sshll.u32 [#allocation4], 4
          %s184 = int_to_ptr.vmem [resolvable:$true] %s183
          %189 = dma.hbm_to_vmem [thread:$0]  %s0, 128, %s184, [#allocation5], 32, 32, 2
        $region16: #{tpu_custom_call.1} parent=11 // pred_fallthru
          _
        // Predicated region
        $region17: #{tpu_custom_call.1} parent=11 // pred_check
          %p190 = pneg %p88
        $region18: #{tpu_custom_call.1} parent=11 // pred_check_branch
          %192 = sbr.rel (%p190) target = $region20
        $region19: #{tpu_custom_call.1} parent=11 // pred_region
          _
        $region20: #{tpu_custom_call.1} parent=11 // pred_fallthru
          _
        // Predicated region
        $region21: #{tpu_custom_call.1} parent=11 // pred_check
          %p193 = pneg %p141
        $region22: #{tpu_custom_call.1} parent=11 // pred_check_branch
          %195 = sbr.rel (%p193) target = $region24
        $region23: #{tpu_custom_call.1} parent=11 // pred_region
          _
        $region24: #{tpu_custom_call.1} parent=11 // pred_fallthru
          _
      $region12: #{tpu_custom_call.1} parent=5 // pred_fallthru
        _
      %p196 = scmp.lt.s32.totalorder %s16, 6
      // Predicated region
      $region25: #{tpu_custom_call.1} parent=5 // pred_check
        %p197 = pneg %p196
      $region26: #{tpu_custom_call.1} parent=5 // pred_check_branch
        %199 = sbr.rel (%p197) target = $region28
      $region27: #{tpu_custom_call.1} parent=5 // pred_region
        // Predicated region
        $region29: #{tpu_custom_call.1} parent=27 // pred_check
          %p200 = pneg %p61
        $region30: #{tpu_custom_call.1} parent=27 // pred_check_branch
          %202 = sbr.rel (%p200) target = $region32
        $region31: #{tpu_custom_call.1} parent=27 // pred_region
          %s203 = sand.u32 %s16, 1
          %s204 = scalar_lea.sflag [#allocation8], %s203
          %s205 = sand.u32 %s51, 1
          %s206 = smul.addr %s205, 128
          %s207 = scalar_lea.vmem [#allocation7], %s206
          %p208 = scmp.lt.s32.totalorder %s16, 3
          %s209 = scalar_select %p208, %s16, 3
          %s210 = smul.u32 16, %s209
          %s212 = ssub.s32 2048, 2048
          %213 = vsyncadd %s204, %s212
          %s214 = smul.addr %s210, 2
          %s215 = smul.addr %s214, 64
          %s216 = scalar_lea.hbm %s1, %s215
          %s217 = sshll.u32 %s207, 4
          %s218 = int_to_ptr.vmem [resolvable:$true] %s217
          %223 = dma.hbm_to_vmem [thread:$0]  %s216, 2048, %s218, %s204, 128, 128, 8
        $region32: #{tpu_custom_call.1} parent=27 // pred_fallthru
          _
        // Predicated region
        $region33: #{tpu_custom_call.1} parent=27 // pred_check
          %p224 = pneg %p114
        $region34: #{tpu_custom_call.1} parent=27 // pred_check_branch
          %226 = sbr.rel (%p224) target = $region36
        $region35: #{tpu_custom_call.1} parent=27 // pred_region
          %s227 = sand.u32 %s16, 1
          %s228 = scalar_lea.sflag [#allocation8], %s227
          %s229 = sand.u32 %s104, 1
          %s230 = smul.addr %s229, 128
          %s231 = scalar_lea.vmem [#allocation9], %s230
          %s232 = ssub.s32 %s16, 4
          %p233 = scmp.gt.s32.totalorder %s232, 0
          %s234 = scalar_select %p233, %s232, 0
          %s235 = smul.u32 16, %s234
          %s237 = ssub.s32 2048, 2048
          %238 = vsyncadd %s228, %s237
          %s239 = smul.addr %s235, 2
          %s240 = smul.addr %s239, 64
          %s241 = scalar_lea.hbm %s3, %s240
          %s242 = sshll.u32 %s231, 4
          %s243 = int_to_ptr.vmem [resolvable:$true] %s242
          %248 = dma.hbm_to_vmem [thread:$0]  %s241, 2048, %s243, %s228, 128, 128, 8
        $region36: #{tpu_custom_call.1} parent=27 // pred_fallthru
          _
      $region28: #{tpu_custom_call.1} parent=5 // pred_fallthru
        _
      %p249 = scmp.le.s32.totalorder 1, %s16
      %p250 = scmp.lt.s32.totalorder %s16, 7
      %p251 = pnand %p249, %p250
      %p252 = pneg %p251
      // Predicated region
      $region37: #{tpu_custom_call.1} parent=5 // pred_check
        _
      $region38: #{tpu_custom_call.1} parent=5 // pred_check_branch
        %254 = sbr.rel (%p251) target = $region40
      $region39: #{tpu_custom_call.1} parent=5 // pred_region
        %s255 = ssub.s32 %s16, 1
        // Predicated region
        $region41: #{tpu_custom_call.1} parent=39 // pred_check
          %p256 = pneg %p37
        $region42: #{tpu_custom_call.1} parent=39 // pred_check_branch
          %258 = sbr.rel (%p256) target = $region44
        $region43: #{tpu_custom_call.1} parent=39 // pred_region
          %259 = dma.done [#allocation5], 128
        $region44: #{tpu_custom_call.1} parent=39 // pred_fallthru
          _
        %s260 = sand.u32 %s21, 1
        %s261 = scalar_lea.sflag [#allocation8], %s260
        %s262 = sand.u32 %s54, 1
        %s263 = smul.addr %s262, 128
        %s264 = scalar_lea.vmem [#allocation7], %s263
        // Predicated region
        $region45: #{tpu_custom_call.1} parent=39 // pred_check
          %p265 = pneg %p67
        $region46: #{tpu_custom_call.1} parent=39 // pred_check_branch
          %267 = sbr.rel (%p265) target = $region48
        $region47: #{tpu_custom_call.1} parent=39 // pred_region
          %268 = dma.done %s261, 2048
        $region48: #{tpu_custom_call.1} parent=39 // pred_fallthru
          _
        %s269 = sand.u32 %s21, 1
        %s270 = scalar_lea.sflag [#allocation8], %s269
        %s271 = sand.u32 %s107, 1
        %s272 = smul.addr %s271, 128
        %s273 = scalar_lea.vmem [#allocation9], %s272
        // Predicated region
        $region49: #{tpu_custom_call.1} parent=39 // pred_check
          %p274 = pneg %p120
        $region50: #{tpu_custom_call.1} parent=39 // pred_check_branch
          %276 = sbr.rel (%p274) target = $region52
        $region51: #{tpu_custom_call.1} parent=39 // pred_region
          %277 = dma.done %s270, 2048
        $region52: #{tpu_custom_call.1} parent=39 // pred_fallthru
          _
        %p278 = pneg %p37
        %p279 = pneg %p34
        %s280 = sand.u32 %s21, 1
        %s281 = scalar_lea.sflag [#allocation8], %s280
        %s282 = sand.u32 %s54, 1
        %s283 = smul.addr %s282, 128
        %s284 = scalar_lea.vmem [#allocation7], %s283
        %p285 = pneg %p67
        %p286 = pneg %p64
        %p287 = pneg %p88
        %p288 = pneg %p85
        %s289 = sand.u32 %s21, 1
        %s290 = scalar_lea.sflag [#allocation8], %s289
        %s291 = sand.u32 %s107, 1
        %s292 = smul.addr %s291, 128
        %s293 = scalar_lea.vmem [#allocation9], %s292
        %p294 = pneg %p120
        %p295 = pneg %p117
        %p296 = pneg %p141
        %p297 = pneg %p138
        %p298 = pneg %p162
        %p299 = pneg %p159
        %p300 = scmp.lt.s32.totalorder %s21, 3
        %s301 = scalar_select %p300, %s21, 3
        %s302 = smul.u32 16, %s301
        %s303 = ssub.s32 %s21, 4
        %p304 = scmp.gt.s32.totalorder %s303, 0
        %s305 = scalar_select %p304, %s303, 0
        %s306 = smul.u32 16, %s305
        %p308 = scmp.lt.s32.totalorder %s21, 4
        // Predicated region
        $region53: #{tpu_custom_call.1} parent=39 // pred_check
          %p309 = pneg %p308
        $region54: #{tpu_custom_call.1} parent=39 // pred_check_branch
          %311 = sbr.rel (%p309) target = $region56
        $region55: #{tpu_custom_call.1} parent=39 // pred_region
          %p312 = scmp.eq.s32.totalorder %s21, 0
          // Predicated region
          $region57: #{tpu_custom_call.1} parent=55 // pred_check
            %p313 = pneg %p312
          $region58: #{tpu_custom_call.1} parent=55 // pred_check_branch
            %315 = sbr.rel (%p313) target = $region60
          $region59: #{tpu_custom_call.1} parent=55 // pred_region
            %v316 = vld [vmem:[%s2] sm:$0x3]
            %v318 = vlaneseq
            %v319 = vshrl.u32 %v318, 7
            %v320 = vsub.s32 0, %v319
            %v321 = vrot.slane %v316, %v320
            %v322 = vlaneseq
            %v323 = vshrl.u32 %v322, 7
            %v324 = vsub.s32 1, %v323
            %v325 = vrot.slane %v316, %v324
            %v326 = vcombine.low %v321, %v325
            %328 = vst [vmem:[#allocation2] sm:$0xff] %v326
          $region60: #{tpu_custom_call.1} parent=55 // pred_fallthru
            _
          %v329 = vld [vmem:[#allocation2] sm:$0xff]
          %s330 = smul.addr %s21, 2
          %s331 = scalar_lea.vmem [#allocation4], %s330
          %v332 = vld [vmem:[%s331] sm:$0x3]
          %v333 = vld [vmem:[%s264] sm:$0xff]
          %v334 = vld [vmem:[%s264 + $0x8] sm:$0xff]
          %v335 = vld [vmem:[%s264 + $0x10] sm:$0xff]
          %v336 = vld [vmem:[%s264 + $0x18] sm:$0xff]
          %v337 = vld [vmem:[%s264 + $0x20] sm:$0xff]
          %v338 = vld [vmem:[%s264 + $0x28] sm:$0xff]
          %v339 = vld [vmem:[%s264 + $0x30] sm:$0xff]
          %v340 = vld [vmem:[%s264 + $0x38] sm:$0xff]
          %v341 = vld [vmem:[%s264 + $0x40] sm:$0xff]
          %v342 = vld [vmem:[%s264 + $0x48] sm:$0xff]
          %v343 = vld [vmem:[%s264 + $0x50] sm:$0xff]
          %v344 = vld [vmem:[%s264 + $0x58] sm:$0xff]
          %v345 = vld [vmem:[%s264 + $0x60] sm:$0xff]
          %v346 = vld [vmem:[%s264 + $0x68] sm:$0xff]
          %v347 = vld [vmem:[%s264 + $0x70] sm:$0xff]
          %v348 = vld [vmem:[%s264 + $0x78] sm:$0xff]
          %v365 = vunpack.c.l.b16 %v333
          %v366 = vunpack.c.h.b16 %v333
          %v367 = vunpack.c.l.b16 %v334
          %v368 = vunpack.c.h.b16 %v334
          %v369 = vunpack.c.l.b16 %v335
          %v370 = vunpack.c.h.b16 %v335
          %v371 = vunpack.c.l.b16 %v336
          %v372 = vunpack.c.h.b16 %v336
          %v373 = vunpack.c.l.b16 %v337
          %v374 = vunpack.c.h.b16 %v337
          %v375 = vunpack.c.l.b16 %v338
          %v376 = vunpack.c.h.b16 %v338
          %v377 = vunpack.c.l.b16 %v339
          %v378 = vunpack.c.h.b16 %v339
          %v379 = vunpack.c.l.b16 %v340
          %v380 = vunpack.c.h.b16 %v340
          %v381 = vunpack.c.l.b16 %v341
          %v382 = vunpack.c.h.b16 %v341
          %v383 = vunpack.c.l.b16 %v342
          %v384 = vunpack.c.h.b16 %v342
          %v385 = vunpack.c.l.b16 %v343
          %v386 = vunpack.c.h.b16 %v343
          %v387 = vunpack.c.l.b16 %v344
          %v388 = vunpack.c.h.b16 %v344
          %v389 = vunpack.c.l.b16 %v345
          %v390 = vunpack.c.h.b16 %v345
          %v391 = vunpack.c.l.b16 %v346
          %v392 = vunpack.c.h.b16 %v346
          %v393 = vunpack.c.l.b16 %v347
          %v394 = vunpack.c.h.b16 %v347
          %v395 = vunpack.c.l.b16 %v348
          %v396 = vunpack.c.h.b16 %v348
          %v397 = vpack.c.b16 %v367, %v365
          %v398 = vpack.c.b16 %v368, %v366
          %v399 = vpack.c.b16 %v371, %v369
          %v400 = vpack.c.b16 %v372, %v370
          %v401 = vpack.c.b16 %v375, %v373
          %v402 = vpack.c.b16 %v376, %v374
          %v403 = vpack.c.b16 %v379, %v377
          %v404 = vpack.c.b16 %v380, %v378
          %v405 = vpack.c.b16 %v383, %v381
          %v406 = vpack.c.b16 %v384, %v382
          %v407 = vpack.c.b16 %v387, %v385
          %v408 = vpack.c.b16 %v388, %v386
          %v409 = vpack.c.b16 %v391, %v389
          %v410 = vpack.c.b16 %v392, %v390
          %v411 = vpack.c.b16 %v395, %v393
          %v412 = vpack.c.b16 %v396, %v394
          %429 = vmatprep.subr.bf16.mxu0 %v398
          %430 = vmatpush1.bf16.msra.mxu0 %v397
          %431 = vmatprep.subr.bf16.mxu0 %v400
          %432 = vmatpush1.bf16.msra.mxu0 %v399
          %433 = vmatprep.subr.bf16.mxu0 %v402
          %434 = vmatpush1.bf16.msra.mxu0 %v401
          %435 = vmatprep.subr.bf16.mxu0 %v404
          %436 = vmatpush1.bf16.msra.mxu0 %v403
          %437 = vmatprep.subr.bf16.mxu0 %v406
          %438 = vmatpush1.bf16.msra.mxu0 %v405
          %439 = vmatprep.subr.bf16.mxu0 %v408
          %440 = vmatpush1.bf16.msra.mxu0 %v407
          %441 = vmatprep.subr.bf16.mxu0 %v410
          %442 = vmatpush1.bf16.msra.mxu0 %v409
          %443 = vmatprep.subr.bf16.mxu0 %v412
          %444 = vmatpush1.bf16.msra.mxu0 %v411
          %445 = vmatprep.subr.bf16.mxu0 0
          %446 = vmatpush1.bf16.msra.mxu0 0
          %447 = vmatprep.subr.bf16.mxu0 0
          %448 = vmatpush1.bf16.msra.mxu0 0
          %449 = vmatprep.subr.bf16.mxu0 0
          %450 = vmatpush1.bf16.msra.mxu0 0
          %451 = vmatprep.subr.bf16.mxu0 0
          %452 = vmatpush1.bf16.msra.mxu0 0
          %453 = vmatprep.subr.bf16.mxu0 0
          %454 = vmatpush1.bf16.msra.mxu0 0
          %455 = vmatprep.subr.bf16.mxu0 0
          %456 = vmatpush1.bf16.msra.mxu0 0
          %457 = vmatprep.subr.bf16.mxu0 0
          %458 = vmatpush1.bf16.msra.mxu0 0
          %459 = vmatprep.subr.bf16.mxu0 0
          %460 = vmatpush1.bf16.msra.mxu0 0
          %461 = vmatprep.mubr.bf16.mxu0 0
          %462 = vmatmul.mubr.bf16.gmra.mrb[0].mxu0 %v332
          %v463 = vpop.f32.mrb[0].mxu0
          %v464 = vadd.f32 0.0, %v463
          %v465 = vpop.f32.mrb[0].mxu0
          %v466 = vadd.f32 0.0, %v465
          %v467 = vpop.f32.mrb[0].mxu0
          %v468 = vpop.f32.mrb[0].mxu0
          %469 = vdwg.mxu0
          %v472 = vcombine.low %v464, %v466
          %v474 = vadd.f32 %v329, %v472
          %475 = vst [vmem:[#allocation2] sm:$0xff] %v474
          %p476 = scmp.eq.s32.totalorder %s21, 3
          // Predicated region
          $region61: #{tpu_custom_call.1} parent=55 // pred_check
            %p477 = pneg %p476
          $region62: #{tpu_custom_call.1} parent=55 // pred_check_branch
            %479 = sbr.rel (%p477) target = $region64
          $region63: #{tpu_custom_call.1} parent=55 // pred_region
            %v480 = vld [vmem:[#allocation2] sm:$0xff]
            %v481 = vmax.f32 %v480, 0.0
            %v482 = vpack.c.bf16 %v481, %v481
            %483 = vst [vmem:[#allocation3] sm:$0x3] %v482
            %v485 = vcombine.high %v481, %v481
            %v487 = vpack.c.bf16 %v485, %v485
            %s488 = scalar_lea.vmem [#allocation3], 2
            %489 = vst [vmem:[%s488] sm:$0x3] %v487
          $region64: #{tpu_custom_call.1} parent=55 // pred_fallthru
            _
        $region56: #{tpu_custom_call.1} parent=39 // pred_fallthru
          _
        %p490 = scmp.ge.s32.totalorder %s21, 4
        // Predicated region
        $region65: #{tpu_custom_call.1} parent=39 // pred_check
          %p491 = pneg %p490
        $region66: #{tpu_custom_call.1} parent=39 // pred_check_branch
          %493 = sbr.rel (%p491) target = $region68
        $region67: #{tpu_custom_call.1} parent=39 // pred_region
          %s494 = ssub.s32 %s21, 4
          %p495 = scmp.eq.s32.totalorder %s494, 0
          // Predicated region
          $region69: #{tpu_custom_call.1} parent=67 // pred_check
            %p496 = pneg %p495
          $region70: #{tpu_custom_call.1} parent=67 // pred_check_branch
            %498 = sbr.rel (%p496) target = $region72
          $region71: #{tpu_custom_call.1} parent=67 // pred_region
            %v499 = vld [vmem:[%s4] sm:$0x3]
            %v501 = vlaneseq
            %v502 = vshrl.u32 %v501, 7
            %v503 = vsub.s32 0, %v502
            %v504 = vrot.slane %v499, %v503
            %v505 = vlaneseq
            %v506 = vshrl.u32 %v505, 7
            %v507 = vsub.s32 1, %v506
            %v508 = vrot.slane %v499, %v507
            %v509 = vcombine.low %v504, %v508
            %511 = vst [vmem:[#allocation10] sm:$0xff] %v509
          $region72: #{tpu_custom_call.1} parent=67 // pred_fallthru
            _
          %v512 = vld [vmem:[#allocation10] sm:$0xff]
          %s513 = smul.addr %s494, 2
          %s514 = scalar_lea.vmem [#allocation3], %s513
          %v515 = vld [vmem:[%s514] sm:$0x3]
          %v516 = vld [vmem:[%s273] sm:$0xff]
          %v517 = vld [vmem:[%s273 + $0x8] sm:$0xff]
          %v518 = vld [vmem:[%s273 + $0x10] sm:$0xff]
          %v519 = vld [vmem:[%s273 + $0x18] sm:$0xff]
          %v520 = vld [vmem:[%s273 + $0x20] sm:$0xff]
          %v521 = vld [vmem:[%s273 + $0x28] sm:$0xff]
          %v522 = vld [vmem:[%s273 + $0x30] sm:$0xff]
          %v523 = vld [vmem:[%s273 + $0x38] sm:$0xff]
          %v524 = vld [vmem:[%s273 + $0x40] sm:$0xff]
          %v525 = vld [vmem:[%s273 + $0x48] sm:$0xff]
          %v526 = vld [vmem:[%s273 + $0x50] sm:$0xff]
          %v527 = vld [vmem:[%s273 + $0x58] sm:$0xff]
          %v528 = vld [vmem:[%s273 + $0x60] sm:$0xff]
          %v529 = vld [vmem:[%s273 + $0x68] sm:$0xff]
          %v530 = vld [vmem:[%s273 + $0x70] sm:$0xff]
          %v531 = vld [vmem:[%s273 + $0x78] sm:$0xff]
          %v548 = vunpack.c.l.b16 %v516
          %v549 = vunpack.c.h.b16 %v516
          %v550 = vunpack.c.l.b16 %v517
          %v551 = vunpack.c.h.b16 %v517
          %v552 = vunpack.c.l.b16 %v518
          %v553 = vunpack.c.h.b16 %v518
          %v554 = vunpack.c.l.b16 %v519
          %v555 = vunpack.c.h.b16 %v519
          %v556 = vunpack.c.l.b16 %v520
          %v557 = vunpack.c.h.b16 %v520
          %v558 = vunpack.c.l.b16 %v521
          %v559 = vunpack.c.h.b16 %v521
          %v560 = vunpack.c.l.b16 %v522
          %v561 = vunpack.c.h.b16 %v522
          %v562 = vunpack.c.l.b16 %v523
          %v563 = vunpack.c.h.b16 %v523
          %v564 = vunpack.c.l.b16 %v524
          %v565 = vunpack.c.h.b16 %v524
          %v566 = vunpack.c.l.b16 %v525
          %v567 = vunpack.c.h.b16 %v525
          %v568 = vunpack.c.l.b16 %v526
          %v569 = vunpack.c.h.b16 %v526
          %v570 = vunpack.c.l.b16 %v527
          %v571 = vunpack.c.h.b16 %v527
          %v572 = vunpack.c.l.b16 %v528
          %v573 = vunpack.c.h.b16 %v528
          %v574 = vunpack.c.l.b16 %v529
          %v575 = vunpack.c.h.b16 %v529
          %v576 = vunpack.c.l.b16 %v530
          %v577 = vunpack.c.h.b16 %v530
          %v578 = vunpack.c.l.b16 %v531
          %v579 = vunpack.c.h.b16 %v531
          %v580 = vpack.c.b16 %v550, %v548
          %v581 = vpack.c.b16 %v551, %v549
          %v582 = vpack.c.b16 %v554, %v552
          %v583 = vpack.c.b16 %v555, %v553
          %v584 = vpack.c.b16 %v558, %v556
          %v585 = vpack.c.b16 %v559, %v557
          %v586 = vpack.c.b16 %v562, %v560
          %v587 = vpack.c.b16 %v563, %v561
          %v588 = vpack.c.b16 %v566, %v564
          %v589 = vpack.c.b16 %v567, %v565
          %v590 = vpack.c.b16 %v570, %v568
          %v591 = vpack.c.b16 %v571, %v569
          %v592 = vpack.c.b16 %v574, %v572
          %v593 = vpack.c.b16 %v575, %v573
          %v594 = vpack.c.b16 %v578, %v576
          %v595 = vpack.c.b16 %v579, %v577
          %612 = vmatprep.subr.bf16.mxu0 %v581
          %613 = vmatpush1.bf16.msra.mxu0 %v580
          %614 = vmatprep.subr.bf16.mxu0 %v583
          %615 = vmatpush1.bf16.msra.mxu0 %v582
          %616 = vmatprep.subr.bf16.mxu0 %v585
          %617 = vmatpush1.bf16.msra.mxu0 %v584
          %618 = vmatprep.subr.bf16.mxu0 %v587
          %619 = vmatpush1.bf16.msra.mxu0 %v586
          %620 = vmatprep.subr.bf16.mxu0 %v589
          %621 = vmatpush1.bf16.msra.mxu0 %v588
          %622 = vmatprep.subr.bf16.mxu0 %v591
          %623 = vmatpush1.bf16.msra.mxu0 %v590
          %624 = vmatprep.subr.bf16.mxu0 %v593
          %625 = vmatpush1.bf16.msra.mxu0 %v592
          %626 = vmatprep.subr.bf16.mxu0 %v595
          %627 = vmatpush1.bf16.msra.mxu0 %v594
          %628 = vmatprep.subr.bf16.mxu0 0
          %629 = vmatpush1.bf16.msra.mxu0 0
          %630 = vmatprep.subr.bf16.mxu0 0
          %631 = vmatpush1.bf16.msra.mxu0 0
          %632 = vmatprep.subr.bf16.mxu0 0
          %633 = vmatpush1.bf16.msra.mxu0 0
          %634 = vmatprep.subr.bf16.mxu0 0
          %635 = vmatpush1.bf16.msra.mxu0 0
          %636 = vmatprep.subr.bf16.mxu0 0
          %637 = vmatpush1.bf16.msra.mxu0 0
          %638 = vmatprep.subr.bf16.mxu0 0
          %639 = vmatpush1.bf16.msra.mxu0 0
          %640 = vmatprep.subr.bf16.mxu0 0
          %641 = vmatpush1.bf16.msra.mxu0 0
          %642 = vmatprep.subr.bf16.mxu0 0
          %643 = vmatpush1.bf16.msra.mxu0 0
          %644 = vmatprep.mubr.bf16.mxu0 0
          %645 = vmatmul.mubr.bf16.gmra.mrb[0].mxu0 %v515
          %v646 = vpop.f32.mrb[0].mxu0
          %v647 = vadd.f32 0.0, %v646
          %v648 = vpop.f32.mrb[0].mxu0
          %v649 = vadd.f32 0.0, %v648
          %v650 = vpop.f32.mrb[0].mxu0
          %v651 = vpop.f32.mrb[0].mxu0
          %652 = vdwg.mxu0
          %v655 = vcombine.low %v647, %v649
          %v657 = vadd.f32 %v512, %v655
          %658 = vst [vmem:[#allocation10] sm:$0xff] %v657
        $region68: #{tpu_custom_call.1} parent=39 // pred_fallthru
          _
        // Predicated region
        $region73: #{tpu_custom_call.1} parent=39 // pred_check
          %p659 = pneg %p159
        $region74: #{tpu_custom_call.1} parent=39 // pred_check_branch
          %661 = sbr.rel (%p659) target = $region76
        $region75: #{tpu_custom_call.1} parent=39 // pred_region
          %s663 = ssub.s32 128, 128
          %664 = vsyncadd [#allocation6], %s663
          %s666 = sshll.u32 [#allocation10], 4
          %s667 = int_to_ptr.vmem [resolvable:$true] %s666
          %669 = dma.vmem_to_hbm [thread:$0]  %s667, 128, %s5, [#allocation6]
        $region76: #{tpu_custom_call.1} parent=39 // pred_fallthru
          _
        // Predicated region
        $region77: #{tpu_custom_call.1} parent=39 // pred_check
          %p670 = pneg %p159
        $region78: #{tpu_custom_call.1} parent=39 // pred_check_branch
          %672 = sbr.rel (%p670) target = $region80
        $region79: #{tpu_custom_call.1} parent=39 // pred_region
          %673 = dma.done [#allocation6], 128
        $region80: #{tpu_custom_call.1} parent=39 // pred_fallthru
          _
      $region40: #{tpu_custom_call.1} parent=5 // pred_fallthru
        _
      %p674 = scmp.le.s32.totalorder 2, %s16
      // Predicated region
      $region81: #{tpu_custom_call.1} parent=5 // pred_check
        %p675 = pneg %p674
      $region82: #{tpu_custom_call.1} parent=5 // pred_check_branch
        %677 = sbr.rel (%p675) target = $region84
      $region83: #{tpu_custom_call.1} parent=5 // pred_region
        %s678 = ssub.s32 %s16, 2
      $region84: #{tpu_custom_call.1} parent=5 // pred_fallthru
        _
    $region6: #{tpu_custom_call.1} parent=1 // loop_footer
      %s20 = sadd.s32 1, %s16
    $region7: #{tpu_custom_call.1} parent=1 // loop_footer_branch
      %15 = sbr.rel target = $region3
    $region8: #{tpu_custom_call.1} parent=1 // loop_exit
      _
    %679 = vsyncpa [#allocation5], 1
    %s680 = scalar_lea.sflag [#allocation5], 1
    %681 = vsyncpa %s680, 1
    %682 = vsyncpa [#allocation8], 1
    %s683 = scalar_lea.sflag [#allocation8], 1
    %684 = vsyncpa %s683, 1
    %685 = vsyncpa [#allocation6], 1
    %s686 = scalar_lea.sflag [#allocation6], 1
    %687 = vsyncpa %s686, 1

</llo_original>
